<compile_context>
chip_gen: v5e
topology: v5e:2x2
jax: 0.10.0
libtpu: 0.0.40
codegen_flags: <defaults>
</compile_context>

<pallas_src>
import jax
import jax.numpy as jnp
from jax.experimental import pallas as pl
from jax.experimental.pallas import tpu as pltpu


def fc_kernel(w_ref, x_ref, b_ref, o_ref):
    # w_ref: (D_out, D_in), x_ref: (D_in, TB), b_ref: (D_out, 1), o_ref: (D_out, TB)
    y = jnp.dot(w_ref[...], x_ref[...], preferred_element_type=jnp.float32)
    y = y + b_ref[...]
    o_ref[...] = y.astype(o_ref.dtype)


def fcnet_forward(x, weight, bias, *, tb=512):
    """x: (B, 30) f32, weight: (2, 30) f32, bias: (2,) f32 -> (B, 2) f32."""
    B, D_in = x.shape
    D_out = weight.shape[0]

    # Batch tile on the lane axis: multiple of 128, no bigger than needed.
    TB = min(tb, pl.cdiv(B, 128) * 128)
    TB = pl.cdiv(max(TB, 128), 128) * 128
    B_pad = pl.cdiv(B, TB) * TB

    # Lane-dense layout: batch on lanes, features (30) on sublanes.
    x_t = x.T                                   # (D_in, B)
    if B_pad != B:
        x_t = jnp.pad(x_t, ((0, 0), (0, B_pad - B)))  # zero-pad tail columns
    b2d = bias.reshape(D_out, 1)                # (D_out, 1)

    grid = (B_pad // TB,)

    out_t = pl.pallas_call(
        fc_kernel,
        out_shape=jax.ShapeDtypeStruct((D_out, B_pad), x.dtype),
        grid_spec=pltpu.PrefetchScalarGridSpec(
            num_scalar_prefetch=0,
            grid=grid,
            in_specs=[
                pl.BlockSpec((D_out, D_in), lambda i: (0, 0)),   # weight, resident
                pl.BlockSpec((D_in, TB), lambda i: (0, i)),      # x tile, pipelined
                pl.BlockSpec((D_out, 1), lambda i: (0, 0)),      # bias, resident
            ],
            out_specs=pl.BlockSpec((D_out, TB), lambda i: (0, i)),
        ),
        compiler_params=pltpu.CompilerParams(
            # Batch tiles are independent -> shard across TCs on v7x.
            dimension_semantics=("parallel",),
        ),
        cost_estimate=pl.CostEstimate(
            flops=2 * B_pad * D_in * D_out,
            transcendentals=0,
            bytes_accessed=B_pad * D_in * 4 + B_pad * D_out * 4 + D_in * D_out * 4,
        ),
    )(weight, x_t, b2d)

    # Drop padded tail columns, back to (B, D_out).
    return out_t[:, :B].T


if __name__ == "__main__":
    key = jax.random.PRNGKey(0)
    k_x, k_w, k_b, k_x2 = jax.random.split(key, 4)

    D_in, D_out = 30, 2

    # Deterministic params matching nn.Linear(30, 2) init:
    # uniform(-1/sqrt(fan_in), 1/sqrt(fan_in)).
    bound = 1.0 / (D_in ** 0.5)
    weight = jax.random.uniform(k_w, (D_out, D_in), jnp.float32, -bound, bound)
    bias = jax.random.uniform(k_b, (D_out,), jnp.float32, -bound, bound)

    # Small-batch case (single padded tile).
    B = 8
    x = jax.random.normal(k_x, (B, D_in), jnp.float32)
    out = jax.block_until_ready(fcnet_forward(x, weight, bias))
    ref = x @ weight.T + bias
    assert out.shape == (B, D_out)
    assert jnp.allclose(out, ref, atol=1e-5, rtol=1e-5)

    # Multi-tile case with a ragged tail (exercises grid pipelining + padding).
    B2 = 300
    x2 = jax.random.normal(k_x2, (B2, D_in), jnp.float32)
    out2 = jax.block_until_ready(fcnet_forward(x2, weight, bias, tb=128))
    ref2 = x2 @ weight.T + bias
    assert out2.shape == (B2, D_out)
    assert jnp.allclose(out2, ref2, atol=1e-5, rtol=1e-5)

    print("KERNEL_OK")
</pallas_src>

<mosaic_0001>
module attributes {stable_mosaic.version = 11 : i64} {
  func.func @fc_kernel(%arg0: i32, %arg1: memref<2x30xf32, #tpu.memory_space<vmem>>, %arg2: memref<30x128xf32, #tpu.memory_space<vmem>>, %arg3: memref<2x1xf32, #tpu.memory_space<vmem>>, %arg4: memref<2x128xf32, #tpu.memory_space<vmem>>) attributes {dimension_semantics = [#tpu.dimension_semantics<parallel>], iteration_bounds = array<i64: 1>, scalar_prefetch = 0 : i64, scratch_operands = 0 : i64, tpu.core_type = #tpu.core_type<tc>, window_params = [{pipeline_mode = #tpu.pipeline_mode<synchronous>, transform_indices = @transform_0, window_bounds = array<i64: 2, 30>}, {transform_indices = @transform_1, window_bounds = array<i64: 30, 128>}, {pipeline_mode = #tpu.pipeline_mode<synchronous>, transform_indices = @transform_2, window_bounds = array<i64: 2, 1>}, {transform_indices = @transform_3, window_bounds = array<i64: 2, 128>}]} {
    %c0 = arith.constant 0 : index
    %c0_0 = arith.constant 0 : index
    %0 = vector.load %arg1[%c0, %c0_0] : memref<2x30xf32, #tpu.memory_space<vmem>>, vector<2x30xf32>
    %c0_1 = arith.constant 0 : index
    %c0_2 = arith.constant 0 : index
    %1 = vector.load %arg2[%c0_1, %c0_2] : memref<30x128xf32, #tpu.memory_space<vmem>>, vector<30x128xf32>
    %cst = arith.constant dense<0.000000e+00> : vector<2x128xf32>
    %2 = tpu.matmul %0, %1, %cst {dimension_numbers = #tpu.dot_dimension_numbers<[1], [0], [0], [1], [0, 0, 1, 1], [], []>} : vector<2x30xf32>, vector<30x128xf32>, vector<2x128xf32> -> vector<2x128xf32>
    %c0_3 = arith.constant 0 : index
    %c0_4 = arith.constant 0 : index
    %3 = vector.load %arg3[%c0_3, %c0_4] : memref<2x1xf32, #tpu.memory_space<vmem>>, vector<2x1xf32>
    %4 = vector.broadcast %3 : vector<2x1xf32> to vector<2x128xf32>
    %5 = arith.addf %2, %4 : vector<2x128xf32>
    %c0_5 = arith.constant 0 : index
    %c0_6 = arith.constant 0 : index
    %6 = vector.load %arg4[%c0_5, %c0_6] : memref<2x128xf32, #tpu.memory_space<vmem>>, vector<2x128xf32>
    tpu.vector_store %arg4[%c0_5, %c0_6], %5 {strides = array<i32>} : memref<2x128xf32, #tpu.memory_space<vmem>>, vector<2x128xf32>,
    return
  }
  func.func @transform_0(%arg0: i32) -> (i32, i32) {
    %c0_i32 = arith.constant 0 : i32
    %c0_i32_0 = arith.constant 0 : i32
    %c0_i32_1 = arith.constant 0 : i32
    return %c0_i32, %c0_i32_0 : i32, i32
  }
  func.func @transform_1(%arg0: i32) -> (i32, i32) {
    %c0_i32 = arith.constant 0 : i32
    %c0_i32_0 = arith.constant 0 : i32
    return %c0_i32, %arg0 : i32, i32
  }
  func.func @transform_2(%arg0: i32) -> (i32, i32) {
    %c0_i32 = arith.constant 0 : i32
    %c0_i32_0 = arith.constant 0 : i32
    %c0_i32_1 = arith.constant 0 : i32
    return %c0_i32, %c0_i32_0 : i32, i32
  }
  func.func @transform_3(%arg0: i32) -> (i32, i32) {
    %c0_i32 = arith.constant 0 : i32
    %c0_i32_0 = arith.constant 0 : i32
    return %c0_i32, %arg0 : i32, i32
  }
}

</mosaic_0001>

<llo_original>
// kernel: tpu_custom_call.1
$region0: #{tpu_custom_call.1}
  #allocation0 [shape = 'u32[]', space=smem, size = 0x4, offset = 0x4, fixed_abs, tag = 'smem constant byte address 0x4 - core index']
  #allocation1 [shape = 'u32[72,128]{1,0:T(1,128)}', space=vmem, size = 0x9000, scoped, tag = 'internal scratch']
  %s0 = inlined_call_operand.vmem [shape: f32[2,30], index: 0, kind: input, shape index: {}]
  %s1 = inlined_call_operand.hbm [shape: f32[30,128], index: 1, kind: input, shape index: {}]
  %s2 = inlined_call_operand.vmem [shape: f32[2,1], index: 2, kind: input, shape index: {}]
  %s3 = inlined_call_operand.hbm [shape: f32[2,128], index: 3, kind: output, shape index: {}]
  %s4 = sld [smem:[#allocation0]]
  $region26: #{tpu_custom_call.1} parent=0
    _
  %s6 = ssub.s32 1, %s4
  %s7 = scalar_select 0, %s6, %s4
  $region1: #{tpu_custom_call.1} parent=0
    #allocation2 [shape = 'u8[16384]{0}', space=vmem, size = 0x4000, scoped, tag = 'input window, operand 1, single buffered']
    #allocation3 [shape = 's32[1]{0}', space=sflag, size = 0x4, scoped, tag = 'scoped memory for tpu_custom_call.1']
    #allocation4 [shape = 's32[1]{0}', space=sflag, size = 0x4, scoped, tag = 'scoped memory for tpu_custom_call.1']
    #allocation5 [shape = 'u8[1024]{0}', space=vmem, size = 0x400, scoped, tag = 'output window, operand 0, single buffered']
    %8 = vsyncpa [#allocation3], 0
    %9 = vsyncpa [#allocation4], 0
    // Predicated region
    $region2: #{tpu_custom_call.1} parent=1 // pred_check
      _
    $region3: #{tpu_custom_call.1} parent=1 // pred_check_branch
      %11 = sbr.rel (0) target = $region5
    $region4: #{tpu_custom_call.1} parent=1 // pred_region
      _
    $region5: #{tpu_custom_call.1} parent=1 // pred_fallthru
      _
    // Predicated region
    $region6: #{tpu_custom_call.1} parent=1 // pred_check
      _
    $region7: #{tpu_custom_call.1} parent=1 // pred_check_branch
      %13 = sbr.rel (0) target = $region9
    $region8: #{tpu_custom_call.1} parent=1 // pred_region
      %15 = vsyncadd [#allocation3], 0
      %s16 = sshll.u32 %s1, 4
      %s17 = int_to_ptr.hbm [resolvable:$true] %s16
      %s18 = sshll.u32 [#allocation2], 4
      %s19 = int_to_ptr.vmem [resolvable:$true] %s18
      %24 = dma.hbm_to_vmem [thread:$0]  %s17, 512, %s19, [#allocation3], 128, 128, 8
    $region9: #{tpu_custom_call.1} parent=1 // pred_fallthru
      _
    // Predicated region
    $region10: #{tpu_custom_call.1} parent=1 // pred_check
      _
    $region11: #{tpu_custom_call.1} parent=1 // pred_check_branch
      %26 = sbr.rel (0) target = $region13
    $region12: #{tpu_custom_call.1} parent=1 // pred_region
      _
    $region13: #{tpu_custom_call.1} parent=1 // pred_fallthru
      _
    // Predicated region
    $region14: #{tpu_custom_call.1} parent=1 // pred_check
      _
    $region15: #{tpu_custom_call.1} parent=1 // pred_check_branch
      %28 = sbr.rel (0) target = $region17
    $region16: #{tpu_custom_call.1} parent=1 // pred_region
      %30 = dma.done [#allocation3], 512
    $region17: #{tpu_custom_call.1} parent=1 // pred_fallthru
      _
    %v31 = vld [vmem:[%s0] sm:$0x3]
    %v32 = vld [vmem:[#allocation2] sm:$0xff]
    %v33 = vld [vmem:[#allocation2 + $0x8] sm:$0xff]
    %v34 = vld [vmem:[#allocation2 + $0x10] sm:$0xff]
    %v35 = vld [vmem:[#allocation2 + $0x18] sm:$0x3f]
    %v36 = vld [vmem:[%s2] sm:$0x3]
    %38 = vset.pattern.permute.xlu0 0
    %39 = vperm.xlu0 %38, %v36
    %v40 = vpop.permute.xlu0 %39
    %vm42 = vcmask 244736
    %v44 = vsel %vm42, %v31, 0
    %vm46 = vcmask 1045504
    %v48 = vsel %vm46, %v35, 0
    %50 = vmatpush.msra.mxu0 0.0
    %51 = vmatpush.msra.mxu0 0.0
    %52 = vmatpush.msra.mxu0 0.0
    %53 = vmatpush.msra.mxu0 0.0
    %54 = vmatpush.msra.mxu0 0.0
    %55 = vmatpush.msra.mxu0 0.0
    %56 = vmatpush.msra.mxu0 0.0
    %57 = vmatpush.msra.mxu0 0.0
    %58 = vmatpush.msra.mxu0 0.0
    %59 = vmatpush.msra.mxu0 0.0
    %60 = vmatpush.msra.mxu0 0.0
    %61 = vmatpush.msra.mxu0 0.0
    %62 = vmatpush.msra.mxu0 %v48
    %63 = vmatpush.msra.mxu0 %v34
    %64 = vmatpush.msra.mxu0 %v33
    %65 = vmatpush.msra.mxu0 %v32
    %66 = vmatmul.f32.gmra.mxu0 %v44
    %v67 = vpop.f32.mrf.mxu0
    %v68 = vadd.f32 %v40, %v67
    %69 = vdwg.mxu0
    %70 = vst [vmem:[#allocation5] sm:$0x3] %v68
    // Predicated region
    $region18: #{tpu_custom_call.1} parent=1 // pred_check
      _
    $region19: #{tpu_custom_call.1} parent=1 // pred_check_branch
      %72 = sbr.rel (0) target = $region21
    $region20: #{tpu_custom_call.1} parent=1 // pred_region
      %74 = vsyncadd [#allocation4], 0
      %s76 = sshll.u32 [#allocation5], 4
      %s77 = int_to_ptr.vmem [resolvable:$true] %s76
      %s78 = sshll.u32 %s3, 4
      %s79 = int_to_ptr.hbm [resolvable:$true] %s78
      %81 = dma.vmem_to_hbm [thread:$0]  %s77, 32, %s79, [#allocation4]
    $region21: #{tpu_custom_call.1} parent=1 // pred_fallthru
      _
    // Predicated region
    $region22: #{tpu_custom_call.1} parent=1 // pred_check
      _
    $region23: #{tpu_custom_call.1} parent=1 // pred_check_branch
      %83 = sbr.rel (0) target = $region25
    $region24: #{tpu_custom_call.1} parent=1 // pred_region
      %85 = dma.done [#allocation4], 32
    $region25: #{tpu_custom_call.1} parent=1 // pred_fallthru
      _
    %86 = vsyncpa [#allocation3], 1
    %87 = vsyncpa [#allocation4], 1

</llo_original>
